<compile_context>
chip_gen: v7x
topology: tpu7x:2x2x1
jax: 0.10.0
libtpu: 0.0.40
codegen_flags: <defaults>
</compile_context>

<pallas_src>
import jax
import jax.numpy as jnp
from jax.experimental import pallas as pl
from jax.experimental.pallas import tpu as pltpu


def _round_up(x, m):
    return (x + m - 1) // m * m


def _cdiv(a, b):
    return (a + b - 1) // b


def _make_kernel(h_p, compute_dtype):
    def kernel(x_ref, wa_ref, b1_ref, w2_ref, bc_ref, o_ref):
        # x tile may arrive in its native dtype (f32) or already bf16.
        x = x_ref[...].astype(compute_dtype)

        # One wide MXU pass: [h_pre | r] = x @ [W1 | Wr]   (f32 accumulation).
        hr = jnp.dot(x, wa_ref[...], preferred_element_type=jnp.float32)

        # Static, 128-aligned slices of the matmul result are free (no copy).
        # f32 tanh on the EUP (kept f32 for v5e and exact parity with the ref;
        # bf16 tanh is a v6e/v7x-only micro-opt if the EUP ever saturates).
        h = jnp.tanh(hr[:, :h_p] + b1_ref[...])
        r = hr[:, h_p:]

        # Second layer + residual + pre-summed bias (b2 + br), f32 accumulation.
        y = jnp.dot(h.astype(compute_dtype), w2_ref[...],
                    preferred_element_type=jnp.float32) + r + bc_ref[...]

        o_ref[...] = y.astype(o_ref.dtype)

    return kernel


def prepare_nn_block_params(w1, b1, w2, b2, wr, br, compute_dtype=jnp.bfloat16):
    """Pad (lane-dense multiples of 128), fuse and cast the block's weights.

    Run ONCE; the result is reused by every forward call, so the per-call
    wrapper only touches x and the output (no repeated weight passes in HBM).
    Weights use the (in, out) layout; biases are (1, out).
    """
    D_in, H = w1.shape
    D_out = w2.shape[1]
    D_in_p = _round_up(D_in, 128)
    H_p = _round_up(H, 128)
    D_out_p = _round_up(D_out, 128)

    def pad2(a, rows, cols):
        return jnp.pad(a, ((0, rows - a.shape[0]), (0, cols - a.shape[1])))

    # Fused first-layer weight: [W1 | Wr] along the output (lane) axis.
    wa = jnp.concatenate(
        [pad2(w1, D_in_p, H_p), pad2(wr, D_in_p, D_out_p)], axis=1
    ).astype(compute_dtype)                               # (D_in_p, H_p + D_out_p)
    w2_p = pad2(w2, H_p, D_out_p).astype(compute_dtype)   # (H_p, D_out_p)
    b1_p = pad2(b1.astype(jnp.float32), 1, H_p)           # biases stay f32
    bc_p = pad2((b2 + br).astype(jnp.float32), 1, D_out_p)

    return dict(wa=wa, w2=w2_p, b1=b1_p, bc=bc_p,
                dims=(D_in, H, D_out, D_in_p, H_p, D_out_p),
                compute_dtype=compute_dtype)


def neural_network_block(x, params, *, tm=512):
    """x: (N, D_in); params from prepare_nn_block_params()."""
    D_in, H, D_out, D_in_p, H_p, D_out_p = params["dims"]
    compute_dtype = params["compute_dtype"]
    N = x.shape[0]
    out_dtype = x.dtype

    # Pad the feature dim only if needed (one fused pad+cast pass); otherwise
    # pass x in its native dtype straight through (cast to bf16 in-kernel).
    if D_in_p != D_in:
        x_in = jnp.pad(x, ((0, 0), (0, D_in_p - D_in))).astype(compute_dtype)
    else:
        x_in = x

    x_item = jnp.dtype(x_in.dtype).itemsize
    out_item = jnp.dtype(out_dtype).itemsize
    cd_item = jnp.dtype(compute_dtype).itemsize

    # Per-generation VMEM ceiling (~20% headroom): v5e/v6e 128 MiB, v7x 64 MiB.
    try:
        cap = int(pltpu.get_tpu_info().vmem_capacity_bytes * 0.8)
    except Exception:
        cap = 51 * 1024 * 1024  # conservative (v7x-sized) fallback

    # Resident weights/biases: Pallas double-buffers every input by default,
    # even grid-invariant ones, hence the 2x.
    # Note: for much wider layers, mark weight specs pl.Buffered(1) and/or add
    # D_out / K grid axes so weights stream instead of sitting fully resident.
    resident = (2 * (D_in_p * (H_p + D_out_p) + H_p * D_out_p) * cd_item
                + 2 * (H_p + D_out_p) * 4)

    def tile_bytes(tm_e):
        return (2 * tm_e * D_in_p * x_item            # x tile double buffer
                + 2 * tm_e * D_out_p * out_item       # out tile double buffer
                + 4 * tm_e * (H_p + D_out_p) * 4)     # f32/bf16 intermediates

    # Batch tile: large (default 512), multiple of 16 rows (bf16 sublane pack),
    # clamped to the batch and shrunk if VMEM-tight.
    tm_eff = max(16, min(_round_up(tm, 16), _round_up(N, 16)))
    while tm_eff > 16 and resident + tile_bytes(tm_eff) > cap:
        tm_eff = max(16, _round_up(tm_eff // 2, 16))
    # Guarantee >=2 grid steps when the batch allows so ("parallel",) can shard
    # the batch across v7x's two TensorCores (negligible cost on 1-TC chips).
    if _cdiv(N, tm_eff) < 2 and N >= 32:
        tm_eff = max(16, _round_up(_cdiv(tm_eff, 2), 16))
    grid = (_cdiv(N, tm_eff),)  # ragged last tile handled by Pallas masking

    vmem_limit = int(min(max(resident + 2 * tile_bytes(tm_eff),
                             32 * 1024 * 1024), cap))

    out = pl.pallas_call(
        _make_kernel(H_p, compute_dtype),
        out_shape=jax.ShapeDtypeStruct((N, D_out_p), out_dtype),
        grid_spec=pltpu.PrefetchScalarGridSpec(
            num_scalar_prefetch=0,
            grid=grid,
            in_specs=[
                pl.BlockSpec((tm_eff, D_in_p), lambda i: (i, 0)),          # x tile
                pl.BlockSpec((D_in_p, H_p + D_out_p), lambda i: (0, 0)),   # [W1|Wr]
                pl.BlockSpec((1, H_p), lambda i: (0, 0)),                  # b1
                pl.BlockSpec((H_p, D_out_p), lambda i: (0, 0)),            # W2
                pl.BlockSpec((1, D_out_p), lambda i: (0, 0)),              # b2+br
            ],
            out_specs=pl.BlockSpec((tm_eff, D_out_p), lambda i: (i, 0)),
        ),
        compiler_params=pltpu.CompilerParams(
            dimension_semantics=("parallel",),
            vmem_limit_bytes=vmem_limit,
        ),
    )(x_in, params["wa"], params["b1"], params["w2"], params["bc"])

    # Strip feature padding only if it was added (batch is never padded).
    return out if D_out_p == D_out else out[:, :D_out]


def reference_f32(x, w1, b1, w2, b2, wr, br):
    h = jnp.tanh(x @ w1 + b1)
    return (h @ w2 + b2) + (x @ wr + br)


def reference_bf16(x, w1, b1, w2, b2, wr, br):
    cd = jnp.bfloat16
    xb = x.astype(cd)
    h = jnp.tanh(
        jnp.dot(xb, w1.astype(cd), preferred_element_type=jnp.float32) + b1)
    y = jnp.dot(h.astype(cd), w2.astype(cd),
                preferred_element_type=jnp.float32) + b2
    r = jnp.dot(xb, wr.astype(cd), preferred_element_type=jnp.float32) + br
    return y + r


if __name__ == "__main__":
    # Small shapes consistent with the module's forward (batch of feature vecs).
    N, D_in, H, D_out = 16, 32, 64, 32

    key = jax.random.PRNGKey(0)
    kx, k1, kb1, k2, kb2, kr, kbr = jax.random.split(key, 7)

    x = jax.random.normal(kx, (N, D_in), dtype=jnp.float32)

    # PyTorch nn.Linear stores W as (out, in) and computes x @ W.T + b; we use
    # the transposed (in, out) layout directly.
    w1 = jax.random.normal(k1, (D_in, H), dtype=jnp.float32) * (1.0 / D_in**0.5)
    b1 = jax.random.normal(kb1, (1, H), dtype=jnp.float32) * 0.1
    w2 = jax.random.normal(k2, (H, D_out), dtype=jnp.float32) * (1.0 / H**0.5)
    b2 = jax.random.normal(kb2, (1, D_out), dtype=jnp.float32) * 0.1
    wr = jax.random.normal(kr, (D_in, D_out), dtype=jnp.float32) * (1.0 / D_in**0.5)
    br = jax.random.normal(kbr, (1, D_out), dtype=jnp.float32) * 0.1

    # One-time weight preparation (hoisted out of the per-call path).
    params = prepare_nn_block_params(w1, b1, w2, b2, wr, br)

    out = neural_network_block(x, params)
    out = jax.block_until_ready(out)
    assert out.shape == (N, D_out)

    # Tight check vs. a bf16-input / f32-accumulate reference (same precision).
    ref_bf16 = reference_bf16(x, w1, b1, w2, b2, wr, br)
    assert jnp.allclose(out, ref_bf16, atol=2e-2, rtol=2e-2), "mismatch vs bf16 ref"

    # Looser check vs. the exact f32 reference (bf16 matmul-input rounding).
    ref_f32 = reference_f32(x, w1, b1, w2, b2, wr, br)
    assert jnp.allclose(out, ref_f32, atol=1e-1, rtol=1e-1), "mismatch vs f32 ref"

    print("KERNEL_OK")
</pallas_src>

<mosaic_0001>
module attributes {stable_mosaic.version = 11 : i64} {
  func.func @kernel(%arg0: i32, %arg1: memref<16x128xbf16, #tpu.memory_space<vmem>>, %arg2: memref<128x256xbf16, #tpu.memory_space<vmem>>, %arg3: memref<1x128xf32, #tpu.memory_space<vmem>>, %arg4: memref<128x128xbf16, #tpu.memory_space<vmem>>, %arg5: memref<1x128xf32, #tpu.memory_space<vmem>>, %arg6: memref<16x128xf32, #tpu.memory_space<vmem>>) attributes {dimension_semantics = [#tpu.dimension_semantics<parallel>], iteration_bounds = array<i64: 1>, scalar_prefetch = 0 : i64, scratch_operands = 0 : i64, tpu.core_type = #tpu.core_type<tc>, window_params = [{transform_indices = @transform_0, window_bounds = array<i64: 16, 128>}, {pipeline_mode = #tpu.pipeline_mode<synchronous>, transform_indices = @transform_1, window_bounds = array<i64: 128, 256>}, {pipeline_mode = #tpu.pipeline_mode<synchronous>, transform_indices = @transform_2, window_bounds = array<i64: 1, 128>}, {pipeline_mode = #tpu.pipeline_mode<synchronous>, transform_indices = @transform_3, window_bounds = array<i64: 128, 128>}, {pipeline_mode = #tpu.pipeline_mode<synchronous>, transform_indices = @transform_4, window_bounds = array<i64: 1, 128>}, {transform_indices = @transform_5, window_bounds = array<i64: 16, 128>}]} {
    %c0 = arith.constant 0 : index
    %c0_0 = arith.constant 0 : index
    %0 = vector.load %arg1[%c0, %c0_0] : memref<16x128xbf16, #tpu.memory_space<vmem>>, vector<16x128xbf16>
    %c0_1 = arith.constant 0 : index
    %c0_2 = arith.constant 0 : index
    %1 = vector.load %arg2[%c0_1, %c0_2] : memref<128x256xbf16, #tpu.memory_space<vmem>>, vector<128x256xbf16>
    %cst = arith.constant dense<0.000000e+00> : vector<16x256xf32>
    %2 = tpu.matmul %0, %1, %cst {dimension_numbers = #tpu.dot_dimension_numbers<[1], [0], [0], [1], [0, 0, 1, 1], [], []>} : vector<16x128xbf16>, vector<128x256xbf16>, vector<16x256xf32> -> vector<16x256xf32>
    %3 = vector.extract_strided_slice %2 {offsets = [0, 0], sizes = [16, 128], strides = [1, 1]} : vector<16x256xf32> to vector<16x128xf32>
    %c0_3 = arith.constant 0 : index
    %c0_4 = arith.constant 0 : index
    %4 = vector.load %arg3[%c0_3, %c0_4] : memref<1x128xf32, #tpu.memory_space<vmem>>, vector<1x128xf32>
    %5 = vector.broadcast %4 : vector<1x128xf32> to vector<16x128xf32>
    %6 = arith.addf %3, %5 : vector<16x128xf32>
    %7 = math.tanh %6 : vector<16x128xf32>
    %8 = vector.extract_strided_slice %2 {offsets = [0, 128], sizes = [16, 128], strides = [1, 1]} : vector<16x256xf32> to vector<16x128xf32>
    %9 = arith.truncf %7 : vector<16x128xf32> to vector<16x128xbf16>
    %c0_5 = arith.constant 0 : index
    %c0_6 = arith.constant 0 : index
    %10 = vector.load %arg4[%c0_5, %c0_6] : memref<128x128xbf16, #tpu.memory_space<vmem>>, vector<128x128xbf16>
    %cst_7 = arith.constant dense<0.000000e+00> : vector<16x128xf32>
    %11 = tpu.matmul %9, %10, %cst_7 {dimension_numbers = #tpu.dot_dimension_numbers<[1], [0], [0], [1], [0, 0, 1, 1], [], []>} : vector<16x128xbf16>, vector<128x128xbf16>, vector<16x128xf32> -> vector<16x128xf32>
    %12 = arith.addf %11, %8 : vector<16x128xf32>
    %c0_8 = arith.constant 0 : index
    %c0_9 = arith.constant 0 : index
    %13 = vector.load %arg5[%c0_8, %c0_9] : memref<1x128xf32, #tpu.memory_space<vmem>>, vector<1x128xf32>
    %14 = vector.broadcast %13 : vector<1x128xf32> to vector<16x128xf32>
    %15 = arith.addf %12, %14 : vector<16x128xf32>
    %c0_10 = arith.constant 0 : index
    %c0_11 = arith.constant 0 : index
    %16 = vector.load %arg6[%c0_10, %c0_11] : memref<16x128xf32, #tpu.memory_space<vmem>>, vector<16x128xf32>
    tpu.vector_store %arg6[%c0_10, %c0_11], %15 {strides = array<i32>} : memref<16x128xf32, #tpu.memory_space<vmem>>, vector<16x128xf32>,
    return
  }
  func.func @transform_0(%arg0: i32) -> (i32, i32) {
    %c0_i32 = arith.constant 0 : i32
    %c0_i32_0 = arith.constant 0 : i32
    return %arg0, %c0_i32 : i32, i32
  }
  func.func @transform_1(%arg0: i32) -> (i32, i32) {
    %c0_i32 = arith.constant 0 : i32
    %c0_i32_0 = arith.constant 0 : i32
    %c0_i32_1 = arith.constant 0 : i32
    return %c0_i32, %c0_i32_0 : i32, i32
  }
  func.func @transform_2(%arg0: i32) -> (i32, i32) {
    %c0_i32 = arith.constant 0 : i32
    %c0_i32_0 = arith.constant 0 : i32
    %c0_i32_1 = arith.constant 0 : i32
    return %c0_i32, %c0_i32_0 : i32, i32
  }
  func.func @transform_3(%arg0: i32) -> (i32, i32) {
    %c0_i32 = arith.constant 0 : i32
    %c0_i32_0 = arith.constant 0 : i32
    %c0_i32_1 = arith.constant 0 : i32
    return %c0_i32, %c0_i32_0 : i32, i32
  }
  func.func @transform_4(%arg0: i32) -> (i32, i32) {
    %c0_i32 = arith.constant 0 : i32
    %c0_i32_0 = arith.constant 0 : i32
    %c0_i32_1 = arith.constant 0 : i32
    return %c0_i32, %c0_i32_0 : i32, i32
  }
  func.func @transform_5(%arg0: i32) -> (i32, i32) {
    %c0_i32 = arith.constant 0 : i32
    %c0_i32_0 = arith.constant 0 : i32
    return %arg0, %c0_i32 : i32, i32
  }
}

</mosaic_0001>

<llo_original>
// kernel: tpu_custom_call.1
$region0: #{tpu_custom_call.1}
  #allocation0 [shape = 'u32[]', space=smem, size = 0x4, offset = 0x4, fixed_abs, tag = 'smem constant byte address 0x4 - core index']
  #allocation1 [shape = 'u32[144,128]{1,0:T(1,128)}', space=vmem, size = 0x12000, scoped, tag = 'internal scratch']
  %s0 = inlined_call_operand.hbm [shape: bf16[16,128], index: 0, kind: input, shape index: {}]
  %s1 = inlined_call_operand.hbm [shape: bf16[128,256], index: 1, kind: input, shape index: {}]
  %s2 = inlined_call_operand.vmem [shape: f32[1,128], index: 2, kind: input, shape index: {}]
  %s3 = inlined_call_operand.hbm [shape: bf16[128,128], index: 3, kind: input, shape index: {}]
  %s4 = inlined_call_operand.vmem [shape: f32[1,128], index: 4, kind: input, shape index: {}]
  %s5 = inlined_call_operand.hbm [shape: f32[16,128], index: 5, kind: output, shape index: {}]
  %s6 = sld [smem:[#allocation0]]
  $region42: #{tpu_custom_call.1} parent=0
    _
  %s8 = ssub.s32 1, %s6
  %s9 = scalar_select 0, %s8, %s6
  $region1: #{tpu_custom_call.1} parent=0
    #allocation2 [shape = 'u8[4096]{0}', space=vmem, size = 0x1000, scoped, tag = 'input window, operand 0, single buffered']
    #allocation3 [shape = 's32[1]{0}', space=sflag, size = 0x4, scoped, tag = 'scoped memory for tpu_custom_call.1']
    #allocation4 [shape = 's32[1]{0}', space=sflag, size = 0x4, scoped, tag = 'scoped memory for tpu_custom_call.1']
    #allocation5 [shape = 'u8[65536]{0}', space=vmem, size = 0x10000, scoped, tag = 'input window, operand 1, single buffered']
    #allocation6 [shape = 's32[1]{0}', space=sflag, size = 0x4, scoped, tag = 'scoped memory for tpu_custom_call.1']
    #allocation7 [shape = 'u8[32768]{0}', space=vmem, size = 0x8000, scoped, tag = 'input window, operand 3, single buffered']
    #allocation8 [shape = 'u8[8192]{0}', space=vmem, size = 0x2000, scoped, tag = 'output window, operand 0, single buffered']
    %10 = vsyncpa [#allocation3], 0
    %11 = vsyncpa [#allocation6], 0
    %12 = vsyncpa [#allocation4], 0
    // Predicated region
    $region2: #{tpu_custom_call.1} parent=1 // pred_check
      _
    $region3: #{tpu_custom_call.1} parent=1 // pred_check_branch
      %14 = sbr.rel (0) target = $region5
    $region4: #{tpu_custom_call.1} parent=1 // pred_region
      %s16 = ssub.s32 128, 128
      %17 = vsyncadd [#allocation3], %s16
      %s18 = sshll.u32 [#allocation2], 4
      %s19 = int_to_ptr.vmem [resolvable:$true] %s18
      %24 = dma.hbm_to_vmem [thread:$0]  %s0, 128, %s19, [#allocation3], 64, 64, 4
    $region5: #{tpu_custom_call.1} parent=1 // pred_fallthru
      _
    // Predicated region
    $region6: #{tpu_custom_call.1} parent=1 // pred_check
      _
    $region7: #{tpu_custom_call.1} parent=1 // pred_check_branch
      %26 = sbr.rel (0) target = $region9
    $region8: #{tpu_custom_call.1} parent=1 // pred_region
      %s28 = ssub.s32 2048, 2048
      %29 = vsyncadd [#allocation6], %s28
      %s30 = sshll.u32 [#allocation5], 4
      %s31 = int_to_ptr.vmem [resolvable:$true] %s30
      %36 = dma.hbm_to_vmem [thread:$0]  %s1, 2048, %s31, [#allocation6], 128, 128, 8
    $region9: #{tpu_custom_call.1} parent=1 // pred_fallthru
      _
    // Predicated region
    $region10: #{tpu_custom_call.1} parent=1 // pred_check
      _
    $region11: #{tpu_custom_call.1} parent=1 // pred_check_branch
      %38 = sbr.rel (0) target = $region13
    $region12: #{tpu_custom_call.1} parent=1 // pred_region
      _
    $region13: #{tpu_custom_call.1} parent=1 // pred_fallthru
      _
    // Predicated region
    $region14: #{tpu_custom_call.1} parent=1 // pred_check
      _
    $region15: #{tpu_custom_call.1} parent=1 // pred_check_branch
      %40 = sbr.rel (0) target = $region17
    $region16: #{tpu_custom_call.1} parent=1 // pred_region
      %s42 = ssub.s32 1024, 1024
      %43 = vsyncadd [#allocation6], %s42
      %s44 = sshll.u32 [#allocation7], 4
      %s45 = int_to_ptr.vmem [resolvable:$true] %s44
      %50 = dma.hbm_to_vmem [thread:$0]  %s3, 1024, %s45, [#allocation6], 64, 64, 4
    $region17: #{tpu_custom_call.1} parent=1 // pred_fallthru
      _
    // Predicated region
    $region18: #{tpu_custom_call.1} parent=1 // pred_check
      _
    $region19: #{tpu_custom_call.1} parent=1 // pred_check_branch
      %52 = sbr.rel (0) target = $region21
    $region20: #{tpu_custom_call.1} parent=1 // pred_region
      _
    $region21: #{tpu_custom_call.1} parent=1 // pred_fallthru
      _
    // Predicated region
    $region22: #{tpu_custom_call.1} parent=1 // pred_check
      _
    $region23: #{tpu_custom_call.1} parent=1 // pred_check_branch
      %54 = sbr.rel (0) target = $region25
    $region24: #{tpu_custom_call.1} parent=1 // pred_region
      %55 = dma.done [#allocation3], 128
    $region25: #{tpu_custom_call.1} parent=1 // pred_fallthru
      _
    // Predicated region
    $region26: #{tpu_custom_call.1} parent=1 // pred_check
      _
    $region27: #{tpu_custom_call.1} parent=1 // pred_check_branch
      %57 = sbr.rel (0) target = $region29
    $region28: #{tpu_custom_call.1} parent=1 // pred_region
      %58 = dma.done [#allocation6], 2048
    $region29: #{tpu_custom_call.1} parent=1 // pred_fallthru
      _
    // Predicated region
    $region30: #{tpu_custom_call.1} parent=1 // pred_check
      _
    $region31: #{tpu_custom_call.1} parent=1 // pred_check_branch
      %60 = sbr.rel (0) target = $region33
    $region32: #{tpu_custom_call.1} parent=1 // pred_region
      %61 = dma.done [#allocation6], 1024
    $region33: #{tpu_custom_call.1} parent=1 // pred_fallthru
      _
    %v63 = vld [vmem:[#allocation2] sm:$0xf]
    %v64 = vld [vmem:[#allocation2 + $0x4] sm:$0xf]
    %v65 = vld [vmem:[#allocation5] sm:$0xff]
    %v66 = vld [vmem:[#allocation5 + $0x8] sm:$0xff]
    %v67 = vld [vmem:[#allocation5 + $0x10] sm:$0xff]
    %v68 = vld [vmem:[#allocation5 + $0x18] sm:$0xff]
    %v69 = vld [vmem:[#allocation5 + $0x20] sm:$0xff]
    %v70 = vld [vmem:[#allocation5 + $0x28] sm:$0xff]
    %v71 = vld [vmem:[#allocation5 + $0x30] sm:$0xff]
    %v72 = vld [vmem:[#allocation5 + $0x38] sm:$0xff]
    %v73 = vld [vmem:[#allocation5 + $0x40] sm:$0xff]
    %v74 = vld [vmem:[#allocation5 + $0x48] sm:$0xff]
    %v75 = vld [vmem:[#allocation5 + $0x50] sm:$0xff]
    %v76 = vld [vmem:[#allocation5 + $0x58] sm:$0xff]
    %v77 = vld [vmem:[#allocation5 + $0x60] sm:$0xff]
    %v78 = vld [vmem:[#allocation5 + $0x68] sm:$0xff]
    %v79 = vld [vmem:[#allocation5 + $0x70] sm:$0xff]
    %v80 = vld [vmem:[#allocation5 + $0x78] sm:$0xff]
    %v83 = vunpack.c.l.b16 %v63
    %v84 = vunpack.c.l.b16 %v64
    %v85 = vpack.c.b16 %v84, %v83
    %v103 = vunpack.c.l.b16 %v65
    %v104 = vunpack.c.h.b16 %v65
    %v105 = vunpack.c.l.b16 %v66
    %v106 = vunpack.c.h.b16 %v66
    %v107 = vunpack.c.l.b16 %v67
    %v108 = vunpack.c.h.b16 %v67
    %v109 = vunpack.c.l.b16 %v68
    %v110 = vunpack.c.h.b16 %v68
    %v111 = vunpack.c.l.b16 %v69
    %v112 = vunpack.c.h.b16 %v69
    %v113 = vunpack.c.l.b16 %v70
    %v114 = vunpack.c.h.b16 %v70
    %v115 = vunpack.c.l.b16 %v71
    %v116 = vunpack.c.h.b16 %v71
    %v117 = vunpack.c.l.b16 %v72
    %v118 = vunpack.c.h.b16 %v72
    %v119 = vunpack.c.l.b16 %v73
    %v120 = vunpack.c.h.b16 %v73
    %v121 = vunpack.c.l.b16 %v74
    %v122 = vunpack.c.h.b16 %v74
    %v123 = vunpack.c.l.b16 %v75
    %v124 = vunpack.c.h.b16 %v75
    %v125 = vunpack.c.l.b16 %v76
    %v126 = vunpack.c.h.b16 %v76
    %v127 = vunpack.c.l.b16 %v77
    %v128 = vunpack.c.h.b16 %v77
    %v129 = vunpack.c.l.b16 %v78
    %v130 = vunpack.c.h.b16 %v78
    %v131 = vunpack.c.l.b16 %v79
    %v132 = vunpack.c.h.b16 %v79
    %v133 = vunpack.c.l.b16 %v80
    %v134 = vunpack.c.h.b16 %v80
    %v135 = vpack.c.b16 %v105, %v103
    %v136 = vpack.c.b16 %v106, %v104
    %v137 = vpack.c.b16 %v109, %v107
    %v138 = vpack.c.b16 %v110, %v108
    %v139 = vpack.c.b16 %v113, %v111
    %v140 = vpack.c.b16 %v114, %v112
    %v141 = vpack.c.b16 %v117, %v115
    %v142 = vpack.c.b16 %v118, %v116
    %v143 = vpack.c.b16 %v121, %v119
    %v144 = vpack.c.b16 %v122, %v120
    %v145 = vpack.c.b16 %v125, %v123
    %v146 = vpack.c.b16 %v126, %v124
    %v147 = vpack.c.b16 %v129, %v127
    %v148 = vpack.c.b16 %v130, %v128
    %v149 = vpack.c.b16 %v133, %v131
    %v150 = vpack.c.b16 %v134, %v132
    %167 = vmatprep.subr.bf16.mxu0 %v136
    %168 = vmatpush1.bf16.msra.mxu0 %v135
    %169 = vmatprep.subr.bf16.mxu0 %v138
    %170 = vmatpush1.bf16.msra.mxu0 %v137
    %171 = vmatprep.subr.bf16.mxu0 %v140
    %172 = vmatpush1.bf16.msra.mxu0 %v139
    %173 = vmatprep.subr.bf16.mxu0 %v142
    %174 = vmatpush1.bf16.msra.mxu0 %v141
    %175 = vmatprep.subr.bf16.mxu0 %v144
    %176 = vmatpush1.bf16.msra.mxu0 %v143
    %177 = vmatprep.subr.bf16.mxu0 %v146
    %178 = vmatpush1.bf16.msra.mxu0 %v145
    %179 = vmatprep.subr.bf16.mxu0 %v148
    %180 = vmatpush1.bf16.msra.mxu0 %v147
    %181 = vmatprep.subr.bf16.mxu0 %v150
    %182 = vmatpush1.bf16.msra.mxu0 %v149
    %183 = vmatprep.subr.bf16.mxu0 0
    %184 = vmatpush1.bf16.msra.mxu0 0
    %185 = vmatprep.subr.bf16.mxu0 0
    %186 = vmatpush1.bf16.msra.mxu0 0
    %187 = vmatprep.subr.bf16.mxu0 0
    %188 = vmatpush1.bf16.msra.mxu0 0
    %189 = vmatprep.subr.bf16.mxu0 0
    %190 = vmatpush1.bf16.msra.mxu0 0
    %191 = vmatprep.subr.bf16.mxu0 0
    %192 = vmatpush1.bf16.msra.mxu0 0
    %193 = vmatprep.subr.bf16.mxu0 0
    %194 = vmatpush1.bf16.msra.mxu0 0
    %195 = vmatprep.subr.bf16.mxu0 0
    %196 = vmatpush1.bf16.msra.mxu0 0
    %197 = vmatprep.subr.bf16.mxu0 0
    %198 = vmatpush1.bf16.msra.mxu0 0
    %199 = vmatprep.mubr.bf16.mxu0 0
    %200 = vmatmul.mubr.bf16.gmra.mrb[0].mxu0 %v85
    %v201 = vpop.f32.mrb[0].mxu0
    %v202 = vadd.f32 0.0, %v201
    %v203 = vpop.f32.mrb[0].mxu0
    %v204 = vadd.f32 0.0, %v203
    %v205 = vpop.f32.mrb[0].mxu0
    %v206 = vadd.f32 0.0, %v205
    %v207 = vpop.f32.mrb[0].mxu0
    %v208 = vadd.f32 0.0, %v207
    %209 = vdwg.mxu0
    %v210 = vld [vmem:[%s2] sm:$0x1]
    %v212 = vlaneseq
    %v213 = vshrl.u32 %v212, 7
    %v214 = vsub.s32 0, %v213
    %v215 = vrot.slane %v210, %v214
    %v217 = vadd.f32 %v202, %v215
    %v218 = vadd.f32 %v206, %v215
    %v219 = vtanh.pop %v217
    %v220 = vtanh.pop %v218
    %v221 = vpack.c.bf16 %v220, %v219
    %v222 = vld [vmem:[#allocation7] sm:$0xf]
    %v223 = vld [vmem:[#allocation7 + $0x4] sm:$0xf]
    %v224 = vld [vmem:[#allocation7 + $0x8] sm:$0xf]
    %v225 = vld [vmem:[#allocation7 + $0xc] sm:$0xf]
    %v226 = vld [vmem:[#allocation7 + $0x10] sm:$0xf]
    %v227 = vld [vmem:[#allocation7 + $0x14] sm:$0xf]
    %v228 = vld [vmem:[#allocation7 + $0x18] sm:$0xf]
    %v229 = vld [vmem:[#allocation7 + $0x1c] sm:$0xf]
    %v230 = vld [vmem:[#allocation7 + $0x20] sm:$0xf]
    %v231 = vld [vmem:[#allocation7 + $0x24] sm:$0xf]
    %v232 = vld [vmem:[#allocation7 + $0x28] sm:$0xf]
    %v233 = vld [vmem:[#allocation7 + $0x2c] sm:$0xf]
    %v234 = vld [vmem:[#allocation7 + $0x30] sm:$0xf]
    %v235 = vld [vmem:[#allocation7 + $0x34] sm:$0xf]
    %v236 = vld [vmem:[#allocation7 + $0x38] sm:$0xf]
    %v237 = vld [vmem:[#allocation7 + $0x3c] sm:$0xf]
    %v254 = vunpack.c.l.b16 %v222
    %v255 = vunpack.c.l.b16 %v223
    %v256 = vunpack.c.l.b16 %v224
    %v257 = vunpack.c.l.b16 %v225
    %v258 = vunpack.c.l.b16 %v226
    %v259 = vunpack.c.l.b16 %v227
    %v260 = vunpack.c.l.b16 %v228
    %v261 = vunpack.c.l.b16 %v229
    %v262 = vunpack.c.l.b16 %v230
    %v263 = vunpack.c.l.b16 %v231
    %v264 = vunpack.c.l.b16 %v232
    %v265 = vunpack.c.l.b16 %v233
    %v266 = vunpack.c.l.b16 %v234
    %v267 = vunpack.c.l.b16 %v235
    %v268 = vunpack.c.l.b16 %v236
    %v269 = vunpack.c.l.b16 %v237
    %v270 = vpack.c.b16 %v255, %v254
    %v271 = vpack.c.b16 %v257, %v256
    %v272 = vpack.c.b16 %v259, %v258
    %v273 = vpack.c.b16 %v261, %v260
    %v274 = vpack.c.b16 %v263, %v262
    %v275 = vpack.c.b16 %v265, %v264
    %v276 = vpack.c.b16 %v267, %v266
    %v277 = vpack.c.b16 %v269, %v268
    %286 = vmatprep.subr.bf16.mxu0 0
    %287 = vmatpush1.bf16.msra.mxu0 %v270
    %288 = vmatprep.subr.bf16.mxu0 0
    %289 = vmatpush1.bf16.msra.mxu0 %v271
    %290 = vmatprep.subr.bf16.mxu0 0
    %291 = vmatpush1.bf16.msra.mxu0 %v272
    %292 = vmatprep.subr.bf16.mxu0 0
    %293 = vmatpush1.bf16.msra.mxu0 %v273
    %294 = vmatprep.subr.bf16.mxu0 0
    %295 = vmatpush1.bf16.msra.mxu0 %v274
    %296 = vmatprep.subr.bf16.mxu0 0
    %297 = vmatpush1.bf16.msra.mxu0 %v275
    %298 = vmatprep.subr.bf16.mxu0 0
    %299 = vmatpush1.bf16.msra.mxu0 %v276
    %300 = vmatprep.subr.bf16.mxu0 0
    %301 = vmatpush1.bf16.msra.mxu0 %v277
    %302 = vmatprep.subr.bf16.mxu0 0
    %303 = vmatpush1.bf16.msra.mxu0 0
    %304 = vmatprep.subr.bf16.mxu0 0
    %305 = vmatpush1.bf16.msra.mxu0 0
    %306 = vmatprep.subr.bf16.mxu0 0
    %307 = vmatpush1.bf16.msra.mxu0 0
    %308 = vmatprep.subr.bf16.mxu0 0
    %309 = vmatpush1.bf16.msra.mxu0 0
    %310 = vmatprep.subr.bf16.mxu0 0
    %311 = vmatpush1.bf16.msra.mxu0 0
    %312 = vmatprep.subr.bf16.mxu0 0
    %313 = vmatpush1.bf16.msra.mxu0 0
    %314 = vmatprep.subr.bf16.mxu0 0
    %315 = vmatpush1.bf16.msra.mxu0 0
    %316 = vmatprep.subr.bf16.mxu0 0
    %317 = vmatpush1.bf16.msra.mxu0 0
    %318 = vmatprep.mubr.bf16.mxu0 0
    %319 = vmatmul.mubr.bf16.gmra.mrb[0].mxu0 %v221
    %v320 = vpop.f32.mrb[0].mxu0
    %v321 = vadd.f32 %v204, %v320
    %v322 = vpop.f32.mrb[0].mxu0
    %v323 = vpop.f32.mrb[0].mxu0
    %v324 = vadd.f32 %v208, %v323
    %v325 = vpop.f32.mrb[0].mxu0
    %326 = vdwg.mxu0
    %v327 = vld [vmem:[%s4] sm:$0x1]
    %v329 = vlaneseq
    %v330 = vshrl.u32 %v329, 7
    %v331 = vsub.s32 0, %v330
    %v332 = vrot.slane %v327, %v331
    %v334 = vadd.f32 %v321, %v332
    %v335 = vadd.f32 %v324, %v332
    %336 = vst [vmem:[#allocation8] sm:$0xff] %v334
    %337 = vst [vmem:[#allocation8 + $0x8] sm:$0xff] %v335
    // Predicated region
    $region34: #{tpu_custom_call.1} parent=1 // pred_check
      _
    $region35: #{tpu_custom_call.1} parent=1 // pred_check_branch
      %339 = sbr.rel (0) target = $region37
    $region36: #{tpu_custom_call.1} parent=1 // pred_region
      %s341 = ssub.s32 256, 256
      %342 = vsyncadd [#allocation4], %s341
      %s343 = sshll.u32 [#allocation8], 4
      %s344 = int_to_ptr.vmem [resolvable:$true] %s343
      %349 = dma.vmem_to_hbm [thread:$0]  %s344, 256, %s5, [#allocation4], 128, 128, 8
    $region37: #{tpu_custom_call.1} parent=1 // pred_fallthru
      _
    // Predicated region
    $region38: #{tpu_custom_call.1} parent=1 // pred_check
      _
    $region39: #{tpu_custom_call.1} parent=1 // pred_check_branch
      %351 = sbr.rel (0) target = $region41
    $region40: #{tpu_custom_call.1} parent=1 // pred_region
      %352 = dma.done [#allocation4], 256
    $region41: #{tpu_custom_call.1} parent=1 // pred_fallthru
      _
    %353 = vsyncpa [#allocation3], 1
    %354 = vsyncpa [#allocation6], 1
    %355 = vsyncpa [#allocation4], 1

</llo_original>
